<compile_context>
chip_gen: v5e
topology: v5e:2x2
jax: 0.10.0
libtpu: 0.0.40
codegen_flags: <defaults>
</compile_context>

<pallas_src>
import jax
import jax.numpy as jnp
import numpy as np
from jax.experimental import pallas as pl
from jax.experimental.pallas import tpu as pltpu

SEQ = 24          # 2 * 12
DIM = 32
FLAT = SEQ * DIM  # 768 = 6 * 128 -> lane-dense


def make_positional_encoding(max_seq_len: int = SEQ, dim: int = DIM) -> jnp.ndarray:
    """Deterministic pe table, matching the torch construction exactly."""
    pos = np.arange(max_seq_len, dtype=np.float32)[:, None]           # (S, 1)
    i = np.arange(dim, dtype=np.float32)                              # (D,)
    denom = np.power(10000.0, (np.floor(i / 2.0) * 2.0) / dim)        # 10000^((i//2*2)/dim)
    pe = pos / denom[None, :]                                         # (S, D)
    pe[:, 0::2] = np.sin(pe[:, 0::2])
    pe[:, 1::2] = np.cos(pe[:, 1::2])
    return jnp.asarray(pe, dtype=jnp.float32)


def _pe_add_kernel(x_ref, pe_ref, o_ref):
    # x_ref: (TB, 768) batch-row tile; pe_ref: (1, 768) resident table (broadcast add).
    o_ref[...] = (x_ref[...] + pe_ref[...]).astype(o_ref.dtype)


def _pick_block_rows(B: int) -> int:
    """Largest batch tile that (a) divides B, (b) leaves >=2 grid steps, (c) fits VMEM."""
    for tb in (1024, 512, 256, 128, 64, 32, 16, 8):
        if B % tb == 0 and B // tb >= 2:
            return tb
    return B  # small / awkward batch: single full-extent block


def positional_encoding_forward(x: jnp.ndarray, pe: jnp.ndarray,
                                *, use_pallas=None) -> jnp.ndarray:
    """x: (B, 768) (or anything reshapeable to (B, 12, 32, 2)). Returns (B, 24, 32)."""
    B = x.shape[0]

    # Glue: reshape/permute exactly like the torch forward.
    xr = x.reshape(B, 12, 32, 2)          # (B, 12, 32, 2)
    xr = jnp.transpose(xr, (0, 3, 1, 2))  # (B, 2, 12, 32)
    # TODO(synk): fuse this permute into the kernel (lane de-interleave) to avoid the
    # extra HBM round trip that the XLA transpose costs.
    x_flat = xr.reshape(B, FLAT)          # (B, 768) lane-dense, free reshape
    pe_flat = pe.reshape(1, FLAT)         # (1, 768), same row-major order as output rows

    out_dtype = jnp.promote_types(x.dtype, pe.dtype)

    if use_pallas is None:
        use_pallas = B >= 64  # tiny batches: let XLA fuse the elementwise add

    if not use_pallas:
        out_flat = x_flat.astype(out_dtype) + pe_flat.astype(out_dtype)
        return out_flat.reshape(B, SEQ, DIM)

    tb = _pick_block_rows(B)
    grid = (B // tb,)

    out_flat = pl.pallas_call(
        _pe_add_kernel,
        out_shape=jax.ShapeDtypeStruct((B, FLAT), out_dtype),
        grid=grid,
        in_specs=[
            pl.BlockSpec((tb, FLAT), lambda i: (i, 0)),   # batch-row tile
            pl.BlockSpec((1, FLAT), lambda i: (0, 0)),    # resident pe (constant block)
        ],
        out_specs=pl.BlockSpec((tb, FLAT), lambda i: (i, 0)),
        compiler_params=pltpu.CompilerParams(
            dimension_semantics=("parallel",),
        ),
    )(x_flat, pe_flat)

    # Dropout(p=0.0) is the identity.  Free reshape back to (B, 24, 32).
    return out_flat.reshape(B, SEQ, DIM)


def _reference(x: jnp.ndarray, pe: jnp.ndarray) -> jnp.ndarray:
    B = x.shape[0]
    xr = jnp.transpose(x.reshape(B, 12, 32, 2), (0, 3, 1, 2)).reshape(B, SEQ, DIM)
    return xr + pe[None, :, :]


if __name__ == "__main__":
    key = jax.random.PRNGKey(0)
    pe = make_positional_encoding()

    # Small shape consistent with the module's forward (B=2, 12*32*2 = 768 features).
    B = 2
    x = jax.random.normal(key, (B, 12 * 32 * 2), dtype=jnp.float32)

    # Force the Pallas path even at tiny B so the kernel is exercised.
    out = positional_encoding_forward(x, pe, use_pallas=True)
    out = jax.block_until_ready(out)
    assert out.shape == (B, SEQ, DIM)
    assert out.dtype == jnp.float32
    np.testing.assert_allclose(np.asarray(out), np.asarray(_reference(x, pe)),
                               rtol=1e-6, atol=1e-6)

    # Moderate batch to exercise the tiled multi-step grid (tb=128, 2 grid steps).
    B2 = 256
    x2 = jax.random.normal(jax.random.PRNGKey(1), (B2, 12 * 32 * 2), dtype=jnp.float32)
    out2 = jax.block_until_ready(positional_encoding_forward(x2, pe))
    np.testing.assert_allclose(np.asarray(out2), np.asarray(_reference(x2, pe)),
                               rtol=1e-6, atol=1e-6)

    print("KERNEL_OK")
</pallas_src>

<mosaic_0001>
module attributes {stable_mosaic.version = 11 : i64} {
  func.func @_pe_add_kernel(%arg0: i32, %arg1: memref<2x768xf32, #tpu.memory_space<vmem>>, %arg2: memref<1x768xf32, #tpu.memory_space<vmem>>, %arg3: memref<2x768xf32, #tpu.memory_space<vmem>>) attributes {dimension_semantics = [#tpu.dimension_semantics<parallel>], iteration_bounds = array<i64: 1>, scalar_prefetch = 0 : i64, scratch_operands = 0 : i64, tpu.core_type = #tpu.core_type<tc>, window_params = [{transform_indices = @transform_0, window_bounds = array<i64: 2, 768>}, {pipeline_mode = #tpu.pipeline_mode<synchronous>, transform_indices = @transform_1, window_bounds = array<i64: 1, 768>}, {transform_indices = @transform_2, window_bounds = array<i64: 2, 768>}]} {
    %c0 = arith.constant 0 : index
    %c0_0 = arith.constant 0 : index
    %0 = vector.load %arg1[%c0, %c0_0] : memref<2x768xf32, #tpu.memory_space<vmem>>, vector<2x768xf32>
    %c0_1 = arith.constant 0 : index
    %c0_2 = arith.constant 0 : index
    %1 = vector.load %arg2[%c0_1, %c0_2] : memref<1x768xf32, #tpu.memory_space<vmem>>, vector<1x768xf32>
    %2 = vector.broadcast %1 : vector<1x768xf32> to vector<2x768xf32>
    %3 = arith.addf %0, %2 : vector<2x768xf32>
    %c0_3 = arith.constant 0 : index
    %c0_4 = arith.constant 0 : index
    %4 = vector.load %arg3[%c0_3, %c0_4] : memref<2x768xf32, #tpu.memory_space<vmem>>, vector<2x768xf32>
    tpu.vector_store %arg3[%c0_3, %c0_4], %3 {strides = array<i32>} : memref<2x768xf32, #tpu.memory_space<vmem>>, vector<2x768xf32>,
    return
  }
  func.func @transform_0(%arg0: i32) -> (i32, i32) {
    %c0_i32 = arith.constant 0 : i32
    %c0_i32_0 = arith.constant 0 : i32
    return %arg0, %c0_i32 : i32, i32
  }
  func.func @transform_1(%arg0: i32) -> (i32, i32) {
    %c0_i32 = arith.constant 0 : i32
    %c0_i32_0 = arith.constant 0 : i32
    %c0_i32_1 = arith.constant 0 : i32
    return %c0_i32, %c0_i32_0 : i32, i32
  }
  func.func @transform_2(%arg0: i32) -> (i32, i32) {
    %c0_i32 = arith.constant 0 : i32
    %c0_i32_0 = arith.constant 0 : i32
    return %arg0, %c0_i32 : i32, i32
  }
}

</mosaic_0001>

<llo_original>
// kernel: tpu_custom_call.1
$region0: #{tpu_custom_call.1}
  #allocation0 [shape = 'u32[]', space=smem, size = 0x4, offset = 0x4, fixed_abs, tag = 'smem constant byte address 0x4 - core index']
  #allocation1 [shape = 'u32[72,128]{1,0:T(1,128)}', space=vmem, size = 0x9000, scoped, tag = 'internal scratch']
  %s0 = inlined_call_operand.hbm [shape: f32[2,768], index: 0, kind: input, shape index: {}]
  %s1 = inlined_call_operand.hbm [shape: f32[1,768], index: 1, kind: input, shape index: {}]
  %s2 = inlined_call_operand.hbm [shape: f32[2,768], index: 2, kind: output, shape index: {}]
  %s3 = sld [smem:[#allocation0]]
  $region26: #{tpu_custom_call.1} parent=0
    _
  %s5 = ssub.s32 1, %s3
  %s6 = scalar_select 0, %s5, %s3
  $region1: #{tpu_custom_call.1} parent=0
    #allocation2 [shape = 'u8[6144]{0}', space=vmem, size = 0x1800, scoped, tag = 'input window, operand 0, single buffered']
    #allocation3 [shape = 's32[1]{0}', space=sflag, size = 0x4, scoped, tag = 'scoped memory for tpu_custom_call.1']
    #allocation4 [shape = 's32[1]{0}', space=sflag, size = 0x4, scoped, tag = 'scoped memory for tpu_custom_call.1']
    #allocation5 [shape = 'u8[3072]{0}', space=vmem, size = 0xc00, scoped, tag = 'input window, operand 1, single buffered']
    #allocation6 [shape = 's32[1]{0}', space=sflag, size = 0x4, scoped, tag = 'scoped memory for tpu_custom_call.1']
    #allocation7 [shape = 'u8[6144]{0}', space=vmem, size = 0x1800, scoped, tag = 'output window, operand 0, single buffered']
    %7 = vsyncpa [#allocation3], 0
    %8 = vsyncpa [#allocation6], 0
    %9 = vsyncpa [#allocation4], 0
    // Predicated region
    $region2: #{tpu_custom_call.1} parent=1 // pred_check
      _
    $region3: #{tpu_custom_call.1} parent=1 // pred_check_branch
      %11 = sbr.rel (0) target = $region5
    $region4: #{tpu_custom_call.1} parent=1 // pred_region
      %13 = vsyncadd [#allocation3], 0
      %s15 = sshll.u32 %s0, 4
      %s16 = int_to_ptr.hbm [resolvable:$true] %s15
      %s17 = sshll.u32 [#allocation2], 4
      %s18 = int_to_ptr.vmem [resolvable:$true] %s17
      %20 = dma.hbm_to_vmem [thread:$0]  %s16, 192, %s18, [#allocation3]
    $region5: #{tpu_custom_call.1} parent=1 // pred_fallthru
      _
    // Predicated region
    $region6: #{tpu_custom_call.1} parent=1 // pred_check
      _
    $region7: #{tpu_custom_call.1} parent=1 // pred_check_branch
      %22 = sbr.rel (0) target = $region9
    $region8: #{tpu_custom_call.1} parent=1 // pred_region
      %24 = vsyncadd [#allocation6], 0
      %s26 = sshll.u32 %s1, 4
      %s27 = int_to_ptr.hbm [resolvable:$true] %s26
      %s28 = sshll.u32 [#allocation5], 4
      %s29 = int_to_ptr.vmem [resolvable:$true] %s28
      %31 = dma.hbm_to_vmem [thread:$0]  %s27, 96, %s29, [#allocation6]
    $region9: #{tpu_custom_call.1} parent=1 // pred_fallthru
      _
    // Predicated region
    $region10: #{tpu_custom_call.1} parent=1 // pred_check
      _
    $region11: #{tpu_custom_call.1} parent=1 // pred_check_branch
      %33 = sbr.rel (0) target = $region13
    $region12: #{tpu_custom_call.1} parent=1 // pred_region
      %35 = dma.done [#allocation3], 192
    $region13: #{tpu_custom_call.1} parent=1 // pred_fallthru
      _
    // Predicated region
    $region14: #{tpu_custom_call.1} parent=1 // pred_check
      _
    $region15: #{tpu_custom_call.1} parent=1 // pred_check_branch
      %37 = sbr.rel (0) target = $region17
    $region16: #{tpu_custom_call.1} parent=1 // pred_region
      %39 = dma.done [#allocation6], 96
    $region17: #{tpu_custom_call.1} parent=1 // pred_fallthru
      _
    %v40 = vld [vmem:[#allocation2] sm:$0xff]
    %v41 = vld [vmem:[#allocation2 + $0x8] sm:$0xf]
    %v42 = vld [vmem:[#allocation5] sm:$0x3f]
    %v44 = vperm.slane %v42, 0
    %v45 = vperm.slane %v42, 1
    %v46 = vperm.slane %v42, 2
    %v47 = vperm.slane %v42, 3
    %v48 = vperm.slane %v42, 4
    %v49 = vperm.slane %v42, 5
    %v50 = vrot.slane %v45, 6
    %v51 = vrot.slane %v46, 4
    %v52 = vrot.slane %v47, 2
    %v53 = vrot.slane %v49, 6
    %vm54 = vcmask 1041408
    %v55 = vsel %vm54, %v44, %v50
    %vm56 = vcmask 1045508
    %v57 = vsel %vm56, %v51, %v52
    %vm58 = vcmask 1043456
    %v59 = vsel %vm58, %v55, %v57
    %v60 = vsel %vm54, %v48, %v53
    %v63 = vadd.f32 %v40, %v59
    %v64 = vadd.f32 %v41, %v60
    %65 = vst [vmem:[#allocation7] sm:$0xff] %v63
    %66 = vst [vmem:[#allocation7 + $0x8] sm:$0xf] %v64
    // Predicated region
    $region18: #{tpu_custom_call.1} parent=1 // pred_check
      _
    $region19: #{tpu_custom_call.1} parent=1 // pred_check_branch
      %68 = sbr.rel (0) target = $region21
    $region20: #{tpu_custom_call.1} parent=1 // pred_region
      %70 = vsyncadd [#allocation4], 0
      %s72 = sshll.u32 [#allocation7], 4
      %s73 = int_to_ptr.vmem [resolvable:$true] %s72
      %s74 = sshll.u32 %s2, 4
      %s75 = int_to_ptr.hbm [resolvable:$true] %s74
      %77 = dma.vmem_to_hbm [thread:$0]  %s73, 192, %s75, [#allocation4]
    $region21: #{tpu_custom_call.1} parent=1 // pred_fallthru
      _
    // Predicated region
    $region22: #{tpu_custom_call.1} parent=1 // pred_check
      _
    $region23: #{tpu_custom_call.1} parent=1 // pred_check_branch
      %79 = sbr.rel (0) target = $region25
    $region24: #{tpu_custom_call.1} parent=1 // pred_region
      %81 = dma.done [#allocation4], 192
    $region25: #{tpu_custom_call.1} parent=1 // pred_fallthru
      _
    %82 = vsyncpa [#allocation3], 1
    %83 = vsyncpa [#allocation6], 1
    %84 = vsyncpa [#allocation4], 1

</llo_original>
